<compile_context>
chip_gen: v6e
topology: v6e:2x2x1
jax: 0.10.0
libtpu: 0.0.40
codegen_flags: <defaults>
</compile_context>

<pallas_src>
import functools
import math

import jax
import jax.numpy as jnp
from jax.experimental import pallas as pl
from jax.experimental.pallas import tpu as pltpu


_CHANS = [1, 16, 32, 64, 128, 256]


def _round_up(x, m):
    return ((x + m - 1) // m) * m


def _tpu_config():
    kind = ""
    try:
        kind = jax.devices()[0].device_kind.lower()
    except Exception:
        pass
    is_v5e = ("v5 lite" in kind) or ("v5e" in kind) or ("v5litepod" in kind)
    vmem_limit = 48 * 1024 * 1024  # safe default (v7x has 64 MiB physical VMEM)
    try:
        cap = int(pltpu.get_tpu_info().vmem_capacity_bytes)
        vmem_limit = max(48 * 1024 * 1024, min(cap * 3 // 4, 112 * 1024 * 1024))
    except Exception:
        pass
    return is_v5e, vmem_limit


_IS_V5E, _VMEM_LIMIT = _tpu_config()
_WIDE_MXU = not _IS_V5E  # v6e / v7x have 256x256 MXUs; v5e is 128-wide


def _pad_channels(x, mult=128):
    c = x.shape[-1]
    cp = _round_up(c, mult)
    if cp == c:
        return x
    return jnp.pad(x, [(0, 0)] * (x.ndim - 1) + [(0, cp - c)])


# ----------------------------------------------------------------------------
# Tiled matmul + bias (Linear layers): bf16 inputs, f32 accumulator, bias on last K step
# ----------------------------------------------------------------------------
def _matmul_bias_kernel(x_ref, w_ref, b_ref, o_ref, acc_ref):
    @pl.when(pl.program_id(2) == 0)
    def _():
        acc_ref[...] = jnp.zeros_like(acc_ref)

    acc_ref[...] += jnp.dot(x_ref[...], w_ref[...],
                            preferred_element_type=jnp.float32)

    @pl.when(pl.program_id(2) == pl.num_programs(2) - 1)
    def _():
        o_ref[...] = (acc_ref[...] + b_ref[...]).astype(o_ref.dtype)


def matmul_bias(x, w, b):
    """y = x @ w + b.  x:(M,K), w:(K,N), b:(N,).  bf16 MXU inputs, f32 accumulation."""
    m, k = x.shape
    _, n = w.shape
    kp = _round_up(k, 128)          # pad K to 128 first (fc1: 686 -> 768, not 1024)
    np_ = _round_up(n, 128)
    pref = 256 if _WIDE_MXU else 128
    tk = pref if kp % pref == 0 else 128
    tn = pref if np_ % pref == 0 else 128
    tk, tn = min(tk, kp), min(tn, np_)
    tm = min(256, _round_up(m, 8))
    mp = _round_up(m, tm)
    xp = jnp.pad(x, ((0, mp - m), (0, kp - k))).astype(jnp.bfloat16)
    wpd = jnp.pad(w, ((0, kp - k), (0, np_ - n))).astype(jnp.bfloat16)
    bp = jnp.pad(b.astype(jnp.float32), (0, np_ - n)).reshape(1, np_)
    grid = (mp // tm, np_ // tn, kp // tk)
    out = pl.pallas_call(
        _matmul_bias_kernel,
        out_shape=jax.ShapeDtypeStruct((mp, np_), jnp.float32),
        grid=grid,
        in_specs=[
            pl.BlockSpec((tm, tk), lambda i, j, kk: (i, kk)),
            pl.BlockSpec((tk, tn), lambda i, j, kk: (kk, j)),
            pl.BlockSpec((1, tn), lambda i, j, kk: (0, j)),
        ],
        out_specs=pl.BlockSpec((tm, tn), lambda i, j, kk: (i, j)),
        scratch_shapes=[pltpu.VMEM((tm, tn), jnp.float32)],
        compiler_params=pltpu.CompilerParams(
            dimension_semantics=("parallel", "parallel", "arbitrary"),
            vmem_limit_bytes=_VMEM_LIMIT,
        ),
        cost_estimate=pl.CostEstimate(
            flops=2 * mp * np_ * kp,
            transcendentals=0,
            # account for grid re-reads: x re-read per N tile, w re-read per M tile
            bytes_accessed=2 * mp * kp * (np_ // tn) + 2 * kp * np_ * (mp // tm)
            + 4 * mp * np_,
        ),
    )(xp, wpd, bp)
    return out[:m, :n]


def linear(x, w_io, b):
    """PyTorch nn.Linear; weight stored pre-transposed as (in, out) at init."""
    return matmul_bias(x, w_io, b)


# ----------------------------------------------------------------------------
# Conv3d (valid, kernel 3, stride 1) — fused taps, no HBM im2col, M-tiled grid
# ----------------------------------------------------------------------------
def _conv_taps_kernel(x_ref, w_ref, b_ref, o_ref, *, tap_offsets, tm):
    # x_ref: (rows_pad, Cin_pad) bf16 — whole batch element, resident across m/cout tiles
    # w_ref: (T, Cin_pad, tn) bf16;  b_ref: (1, tn) f32;  o_ref: (tm, tn) bf16
    base = pl.multiple_of(pl.program_id(2) * tm, 8)
    acc = jnp.broadcast_to(b_ref[...], o_ref.shape)          # bias-initialized f32 acc
    for t, off in enumerate(tap_offsets):                    # consecutive MXU dots
        xs = x_ref[pl.ds(base + off, tm), :]
        acc = acc + jnp.dot(xs, w_ref[t], preferred_element_type=jnp.float32)
    o_ref[...] = acc.astype(o_ref.dtype)


def _conv_pallas(x2, w_tap, b_pad, tap_offsets, m_out, tm):
    """x2: (N, rows_pad, Cin_pad) bf16 with rows_pad >= round_up(m_out, tm) + max(offsets).
    Returns (N, round_up(m_out, tm), Cout_pad) bf16."""
    n, rows_pad, cin_p = x2.shape
    t, _, cout_p = w_tap.shape
    tn = 256 if (_WIDE_MXU and cout_p % 256 == 0) else 128
    m_pad = _round_up(m_out, tm)
    assert rows_pad >= m_pad + max(tap_offsets)
    kernel = functools.partial(_conv_taps_kernel, tap_offsets=tap_offsets, tm=tm)
    return pl.pallas_call(
        kernel,
        out_shape=jax.ShapeDtypeStruct((n, m_pad, cout_p), jnp.bfloat16),
        grid=(n, cout_p // tn, m_pad // tm),
        in_specs=[
            pl.BlockSpec((None, rows_pad, cin_p), lambda b, j, mi: (b, 0, 0)),
            pl.BlockSpec((t, cin_p, tn), lambda b, j, mi: (0, 0, j)),
            pl.BlockSpec((1, tn), lambda b, j, mi: (0, j)),
        ],
        out_specs=pl.BlockSpec((None, tm, tn), lambda b, j, mi: (b, mi, j)),
        compiler_params=pltpu.CompilerParams(
            dimension_semantics=("parallel", "parallel", "parallel"),
            vmem_limit_bytes=_VMEM_LIMIT,
        ),
        cost_estimate=pl.CostEstimate(
            flops=2 * t * n * m_pad * cout_p * cin_p,
            transcendentals=0,
            bytes_accessed=2 * n * rows_pad * cin_p * (cout_p // tn)
            + 2 * t * cin_p * cout_p * n + 2 * n * m_pad * cout_p,
        ),
    )(x2, w_tap, b_pad)


def conv3d(x, w_tap, b_pad):
    """Conv3d(k=3, valid).  x: (N, D, H, W, Cin_pad) (cast to bf16 in-place).
    Returns (flat bf16 (N, M_pad, Cout_pad), meta (do, h, w, ho, wo)).  Flat rows index the
    uncropped (do, h, w) volume; the junk h/w tails are never read by the fused pool."""
    n, d, h, w, cin_p = x.shape
    assert cin_p == w_tap.shape[1]
    do, ho, wo = d - 2, h - 2, w - 2
    m_out = do * h * w
    tap_offsets = tuple(kd * h * w + kh * w + kw
                        for kd in range(3) for kh in range(3) for kw in range(3))
    tm = min(512, _round_up(m_out, 8))
    m_pad = _round_up(m_out, tm)
    rows_need = _round_up(max(d * h * w, m_pad + tap_offsets[-1]), 8)
    x2 = x.reshape(n, d * h * w, cin_p).astype(jnp.bfloat16)   # free reshape, no im2col
    if rows_need > d * h * w:
        # TODO(synk): sizing the upstream producer's out_shape to rows_need would remove
        # this small bf16 halo-pad copy entirely.
        x2 = jnp.pad(x2, ((0, 0), (0, rows_need - d * h * w), (0, 0)))
    out = _conv_pallas(x2, w_tap, b_pad, tap_offsets, m_out, tm)
    return out, (do, h, w, ho, wo)


def conv3d_c1(x, w_fold, b_pad):
    """First conv (Cin=1): all 27 taps folded into the MXU K dim (27 real K, padded to 128)
    via a cheap wrapper im2col.  x: (N, D, H, W, 1) f32.  Returns flat bf16 output + meta."""
    n, d, h, w, c = x.shape
    assert c == 1 and w_fold.shape[0] == 1
    do, ho, wo = d - 2, h - 2, w - 2
    xs = x[..., 0]
    cols = [xs[:, kd:kd + do, kh:kh + ho, kw:kw + wo]
            for kd in range(3) for kh in range(3) for kw in range(3)]
    x27 = jnp.stack(cols, axis=-1).astype(jnp.bfloat16)        # (N, do, ho, wo, 27)
    m_out = do * ho * wo
    tm = min(512, _round_up(m_out, 8))
    m_pad = _round_up(m_out, tm)
    cin_p = w_fold.shape[1]
    x2 = jnp.pad(x27.reshape(n, m_out, 27),
                 ((0, 0), (0, m_pad - m_out), (0, cin_p - 27)))
    out = _conv_pallas(x2, w_fold, b_pad, (0,), m_out, tm)
    return out, (do, ho, wo, ho, wo)


# ----------------------------------------------------------------------------
# MaxPool3d(kernel=3, stride=3, floor) fused with the conv valid-region crop
# ----------------------------------------------------------------------------
def _maxpool3_kernel(x_ref, o_ref, *, h, w, hp, wp):
    dp = o_ref.shape[0]
    c = x_ref.shape[-1]
    x = x_ref[:3 * dp * h * w, :]                               # valid flat rows only
    x = x.reshape(3 * dp, h, w, c)[:, :3 * hp, :3 * wp, :]      # crop fused in-kernel
    m = x.reshape(dp, 3, 3 * hp, 3 * wp, c).max(axis=1)         # reduce kd
    m = m.reshape(dp, hp, 3, 3 * wp, c).max(axis=2)             # reduce kh
    m = m.reshape(dp, hp, wp, 3, c).max(axis=3)                 # reduce kw
    o_ref[...] = m.astype(o_ref.dtype)                          # single lane-dense store


def maxpool3d(conv_flat, meta):
    """conv_flat: (N, M_pad, C) bf16 flat conv output; meta = (do, h, w, ho, wo).
    Returns (N, do//3, ho//3, wo//3, C) bf16.  One whole batch element per grid step."""
    do, h, w, ho, wo = meta
    n, m_pad, c = conv_flat.shape
    dp, hp, wp = do // 3, ho // 3, wo // 3
    assert dp >= 1 and hp >= 1 and wp >= 1
    kernel = functools.partial(_maxpool3_kernel, h=h, w=w, hp=hp, wp=wp)
    # TODO(synk): for volumes too large for one batch element in VMEM, tile over d_out slabs.
    return pl.pallas_call(
        kernel,
        out_shape=jax.ShapeDtypeStruct((n, dp, hp, wp, c), conv_flat.dtype),
        grid=(n,),
        in_specs=[pl.BlockSpec((None, m_pad, c), lambda b: (b, 0, 0))],
        out_specs=pl.BlockSpec((None, dp, hp, wp, c), lambda b: (b, 0, 0, 0, 0)),
        compiler_params=pltpu.CompilerParams(
            dimension_semantics=("parallel",),
            vmem_limit_bytes=_VMEM_LIMIT,
        ),
    )(conv_flat)


# ----------------------------------------------------------------------------
# Deterministic parameters (PyTorch init); stored in padded kernel layouts once.
# ----------------------------------------------------------------------------
def init_params(key):
    params = {"conv_w": [], "conv_b": []}
    for i in range(5):
        key, k1, k2 = jax.random.split(key, 3)
        cin, cout = _CHANS[i], _CHANS[i + 1]
        cin_p, cout_p = _round_up(cin, 128), _round_up(cout, 128)
        bound = 1.0 / math.sqrt(cin * 27)
        w_pt = jax.random.uniform(k1, (cout, cin, 3, 3, 3), jnp.float32, -bound, bound)
        b = jax.random.uniform(k2, (cout,), jnp.float32, -bound, bound)
        w_tap = jnp.transpose(w_pt, (2, 3, 4, 1, 0)).reshape(27, cin, cout)  # tap-major
        if i == 0:
            # conv1: fold the 27 taps into K -> (1, 128, Cout_pad)
            w_fold = jnp.pad(w_tap.reshape(27, cout),
                             ((0, 128 - 27), (0, cout_p - cout)))[None]
            params["conv_w"].append(w_fold.astype(jnp.bfloat16))
        else:
            w_tap = jnp.pad(w_tap, ((0, 0), (0, cin_p - cin), (0, cout_p - cout)))
            params["conv_w"].append(w_tap.astype(jnp.bfloat16))
        params["conv_b"].append(jnp.pad(b, (0, cout_p - cout)).reshape(1, cout_p))
    for name, (fin, fout) in {"fc1": (686, 512), "fc2": (512, 1)}.items():
        key, k1, k2 = jax.random.split(key, 3)
        bound = 1.0 / math.sqrt(fin)
        w_pt = jax.random.uniform(k1, (fout, fin), jnp.float32, -bound, bound)
        b = jax.random.uniform(k2, (fout,), jnp.float32, -bound, bound)
        params[f"{name}_w"] = jnp.transpose(w_pt)    # pre-transposed to (in, out)
        params[f"{name}_b"] = b
    return params


# ----------------------------------------------------------------------------
# Faithful composition of the PyTorch Sequential (kept for fidelity)
# ----------------------------------------------------------------------------
def convnetwork_forward(params, x_ncdhw):
    # TODO(synk): the declared architecture is shape-infeasible end-to-end (five
    # Conv3d(3)+MaxPool3d(3) stages need input >= 485^3 and the flattened features can
    # never equal Linear(686,512)'s 686), so __main__ exercises each stage's kernels on
    # small shapes instead of calling this function.
    h = jnp.transpose(x_ncdhw, (0, 2, 3, 4, 1))                 # NCDHW -> NDHWC
    y, meta = conv3d_c1(h, params["conv_w"][0], params["conv_b"][0])
    h = maxpool3d(y, meta)
    for i in range(1, 5):
        y, meta = conv3d(h, params["conv_w"][i], params["conv_b"][i])
        h = maxpool3d(y, meta)
    h = h[..., :_CHANS[5]].astype(jnp.float32)
    n = h.shape[0]
    flat = jnp.transpose(h, (0, 4, 1, 2, 3)).reshape(n, -1)     # torch Flatten (C,D,H,W)
    z = linear(flat, params["fc1_w"], params["fc1_b"])
    return linear(z, params["fc2_w"], params["fc2_b"])


# ----------------------------------------------------------------------------
# Pure-jnp reference for the first conv + pool (f32) — kernel matches to bf16 precision.
# ----------------------------------------------------------------------------
def _ref_conv1_pool1(x_ndhw1, w_fold, b_pad):
    n, d, h, w, _ = x_ndhw1.shape
    do, ho, wo = d - 2, h - 2, w - 2
    w27 = w_fold[0, :27, :_CHANS[1]].astype(jnp.float32)
    b = b_pad[0, :_CHANS[1]].astype(jnp.float32)
    xs = x_ndhw1[..., 0]
    taps = [xs[:, kd:kd + do, kh:kh + ho, kw:kw + wo]
            for kd in range(3) for kh in range(3) for kw in range(3)]
    conv = jnp.einsum("ndhwt,tc->ndhwc", jnp.stack(taps, axis=-1), w27) + b
    dp, hp, wp = do // 3, ho // 3, wo // 3
    v = conv[:, :3 * dp, :3 * hp, :3 * wp, :]
    return v.reshape(n, dp, 3, hp, 3, wp, 3, _CHANS[1]).max(axis=(2, 4, 6))


# ----------------------------------------------------------------------------
if __name__ == "__main__":
    params = init_params(jax.random.PRNGKey(0))

    # Example input in PyTorch layout (N, C=1, D, H, W)
    x = jax.random.normal(jax.random.PRNGKey(0), (2, 1, 16, 16, 16), jnp.float32)
    results = []

    # Run the forward as far as the architecture's own shape arithmetic permits.
    xc = jnp.transpose(x, (0, 2, 3, 4, 1))                        # (2,16,16,16,1) NDHWC
    c1, meta1 = conv3d_c1(xc, params["conv_w"][0], params["conv_b"][0])
    p1 = maxpool3d(c1, meta1)                                     # (2,4,4,4,128) bf16
    ref1 = _ref_conv1_pool1(xc, params["conv_w"][0], params["conv_b"][0])
    err1 = float(jnp.max(jnp.abs(p1[..., :_CHANS[1]].astype(jnp.float32) - ref1)))
    assert err1 < 1e-1, f"conv1+pool1 mismatch: {err1}"           # bf16 in/out tolerance
    c2, meta2 = conv3d(p1, params["conv_w"][1], params["conv_b"][1])  # valid spatial (2,2,2)
    results.append(c2)

    # TODO(synk): MaxPool3d(3) needs spatial >= 3, so the remaining conv/pool stages are
    # exercised on small synthetic intermediates with their exact parameter shapes.
    for i in range(1, 5):  # conv2..conv5 and pool2..pool5
        hi = jax.random.normal(
            jax.random.PRNGKey(10 + i), (2, 6, 6, 6, _CHANS[i]), jnp.float32)
        hi = _pad_channels(hi, 128)
        ci, mti = conv3d(hi, params["conv_w"][i], params["conv_b"][i])   # flat (2,144,Cpad)
        pi = maxpool3d(ci, mti)                                          # (2,1,1,1,Cpad)
        results.append(pi[..., :_CHANS[i + 1]])

    # Linear(686,512) -> Linear(512,1) on synthetic flattened features of declared width.
    feats = jax.random.normal(jax.random.PRNGKey(99), (2, 686), jnp.float32)
    z = linear(feats, params["fc1_w"], params["fc1_b"])            # (2,512)
    ref_z = feats @ params["fc1_w"] + params["fc1_b"]
    errz = float(jnp.max(jnp.abs(z - ref_z)))
    assert errz < 1e-1, f"fc1 mismatch: {errz}"                    # bf16-input tolerance
    logits = linear(z, params["fc2_w"], params["fc2_b"])           # (2,1)
    results.append(logits)

    for r in results:
        jax.block_until_ready(r)
    assert logits.shape == (2, 1)
    print("KERNEL_OK")
</pallas_src>

<mosaic_0001>
module attributes {stable_mosaic.version = 11 : i64} {
  func.func @_conv_taps_kernel(%arg0: i32, %arg1: i32, %arg2: i32, %arg3: memref<1x3072x128xbf16, #tpu.memory_space<vmem>>, %arg4: memref<1x128x128xbf16, #tpu.memory_space<vmem>>, %arg5: memref<1x128xf32, #tpu.memory_space<vmem>>, %arg6: memref<1x512x128xbf16, #tpu.memory_space<vmem>>) attributes {dimension_semantics = [#tpu.dimension_semantics<parallel>, #tpu.dimension_semantics<parallel>, #tpu.dimension_semantics<parallel>], iteration_bounds = array<i64: 2, 1, 6>, scalar_prefetch = 0 : i64, scratch_operands = 0 : i64, tpu.core_type = #tpu.core_type<tc>, window_params = [{transform_indices = @transform_0, window_bounds = array<i64: 1, 3072, 128>}, {transform_indices = @transform_1, window_bounds = array<i64: 1, 128, 128>}, {transform_indices = @transform_2, window_bounds = array<i64: 1, 128>}, {transform_indices = @transform_3, window_bounds = array<i64: 1, 512, 128>}]} {
    %c512_i32 = arith.constant 512 : i32
    %0 = arith.muli %arg2, %c512_i32 : i32
    %1 = tpu.assume_multiple %0, 8 : i32
    %c0 = arith.constant 0 : index
    %c0_0 = arith.constant 0 : index
    %2 = vector.load %arg5[%c0, %c0_0] : memref<1x128xf32, #tpu.memory_space<vmem>>, vector<1x128xf32>
    %3 = vector.shape_cast %2 : vector<1x128xf32> to vector<1x128xf32>
    %4 = vector.broadcast %3 : vector<1x128xf32> to vector<512x128xf32>
    %c0_i32 = arith.constant 0 : i32
    %5 = arith.addi %1, %c0_i32 : i32
    %c0_1 = arith.constant 0 : index
    %6 = arith.index_cast %5 : i32 to index
    %c0_2 = arith.constant 0 : index
    %7 = vector.load %arg3[%c0_1, %6, %c0_2] : memref<1x3072x128xbf16, #tpu.memory_space<vmem>>, vector<1x512x128xbf16>
    %8 = vector.shape_cast %7 : vector<1x512x128xbf16> to vector<512x128xbf16>
    %c0_3 = arith.constant 0 : index
    %c0_4 = arith.constant 0 : index
    %c0_5 = arith.constant 0 : index
    %9 = vector.load %arg4[%c0_3, %c0_4, %c0_5] : memref<1x128x128xbf16, #tpu.memory_space<vmem>>, vector<1x128x128xbf16>
    %10 = vector.shape_cast %9 : vector<1x128x128xbf16> to vector<128x128xbf16>
    %cst = arith.constant dense<0.000000e+00> : vector<512x128xf32>
    %11 = tpu.matmul %8, %10, %cst {dimension_numbers = #tpu.dot_dimension_numbers<[1], [0], [0], [1], [0, 0, 1, 1], [], []>} : vector<512x128xbf16>, vector<128x128xbf16>, vector<512x128xf32> -> vector<512x128xf32>
    %12 = arith.addf %4, %11 : vector<512x128xf32>
    %13 = arith.truncf %12 : vector<512x128xf32> to vector<512x128xbf16>
    %c0_6 = arith.constant 0 : index
    %c0_7 = arith.constant 0 : index
    %c0_8 = arith.constant 0 : index
    %14 = vector.load %arg6[%c0_6, %c0_7, %c0_8] : memref<1x512x128xbf16, #tpu.memory_space<vmem>>, vector<1x512x128xbf16>
    %15 = vector.shape_cast %14 : vector<1x512x128xbf16> to vector<512x128xbf16>
    %16 = vector.shape_cast %13 : vector<512x128xbf16> to vector<1x512x128xbf16>
    tpu.vector_store %arg6[%c0_6, %c0_7, %c0_8], %16 {strides = array<i32>} : memref<1x512x128xbf16, #tpu.memory_space<vmem>>, vector<1x512x128xbf16>,
    return
  }
  func.func @transform_0(%arg0: i32, %arg1: i32, %arg2: i32) -> (i32, i32, i32) {
    %c0_i32 = arith.constant 0 : i32
    %c0_i32_0 = arith.constant 0 : i32
    %c0_i32_1 = arith.constant 0 : i32
    return %arg0, %c0_i32, %c0_i32_0 : i32, i32, i32
  }
  func.func @transform_1(%arg0: i32, %arg1: i32, %arg2: i32) -> (i32, i32, i32) {
    %c0_i32 = arith.constant 0 : i32
    %c0_i32_0 = arith.constant 0 : i32
    %c0_i32_1 = arith.constant 0 : i32
    return %c0_i32, %c0_i32_0, %arg1 : i32, i32, i32
  }
  func.func @transform_2(%arg0: i32, %arg1: i32, %arg2: i32) -> (i32, i32) {
    %c0_i32 = arith.constant 0 : i32
    %c0_i32_0 = arith.constant 0 : i32
    return %c0_i32, %arg1 : i32, i32
  }
  func.func @transform_3(%arg0: i32, %arg1: i32, %arg2: i32) -> (i32, i32, i32) {
    %c0_i32 = arith.constant 0 : i32
    return %arg0, %arg2, %arg1 : i32, i32, i32
  }
}

</mosaic_0001>

<llo_original>
// kernel: tpu_custom_call.1
$region0: #{tpu_custom_call.1}
  #allocation0 [shape = 'u32[]', space=smem, size = 0x4, offset = 0x4, fixed_abs, tag = 'smem constant byte address 0x4 - core index']
  #allocation1 [shape = 'u32[144,128]{1,0:T(1,128)}', space=vmem, size = 0x12000, scoped, tag = 'internal scratch']
  %s0 = inlined_call_operand.hbm [shape: bf16[2,3072,128], index: 0, kind: input, shape index: {}]
  %s1 = inlined_call_operand.hbm [shape: bf16[1,128,128], index: 1, kind: input, shape index: {}]
  %s2 = inlined_call_operand.hbm [shape: f32[1,128], index: 2, kind: input, shape index: {}]
  %s3 = inlined_call_operand.hbm [shape: bf16[2,3072,128], index: 3, kind: output, shape index: {}]
  %s4 = sld [smem:[#allocation0]]
  $region57: #{tpu_custom_call.1} parent=0
    _
  %s6 = ssub.s32 1, %s4
  %s7 = scalar_select 0, %s6, %s4
  $region1: #{tpu_custom_call.1} parent=0
    #allocation2 [shape = 'u8[1572864]{0}', space=vmem, size = 0x180000, scoped, tag = 'input window, operand 0']
    #allocation3 [shape = 's32[2]{0}', space=sflag, size = 0x8, scoped, tag = 'scoped memory for tpu_custom_call.1']
    #allocation4 [shape = 's32[2]{0}', space=sflag, size = 0x8, scoped, tag = 'scoped memory for tpu_custom_call.1']
    #allocation5 [shape = 'u8[32768]{0}', space=vmem, size = 0x8000, scoped, tag = 'input window, operand 1, single buffered']
    #allocation6 [shape = 's32[1]{0}', space=sflag, size = 0x4, scoped, tag = 'scoped memory for tpu_custom_call.1']
    #allocation7 [shape = 'u8[512]{0}', space=vmem, size = 0x400, scoped, tag = 'input window, operand 2, single buffered']
    #allocation8 [shape = 'u8[262144]{0}', space=vmem, size = 0x40000, scoped, tag = 'output window, operand 0']
    %8 = vsyncpa [#allocation3], 0
    %s9 = scalar_lea.sflag [#allocation3], 1
    %10 = vsyncpa %s9, 0
    %11 = vsyncpa [#allocation6], 0
    %12 = vsyncpa [#allocation4], 0
    %s13 = scalar_lea.sflag [#allocation4], 1
    %14 = vsyncpa %s13, 0
    loop: start=0, step=1, limit=14
    $region2: #{tpu_custom_call.1} parent=1 // loop_pre_header
      _
    $region3: #{tpu_custom_call.1} parent=1 // loop_header
      %s16 = sphi 0, %s20
      %p17 = scmp.ge.s32.totalorder %s16, 14
      %s23 = sphi 0, %s42
      %s24 = sphi 0, %s38
      %s25 = sphi 0, %s34
      %s26 = sphi 0, %s23
      %s27 = sphi 0, %s24
      %s28 = sphi 0, %s25
      %s29 = sphi 0, %s26
      %s30 = sphi 0, %s27
      %s31 = sphi 0, %s28
      %s45 = sphi 0, %s47
      %s48 = sphi 0, %s45
      %s49 = sphi 0, %s48
      %s65 = sphi 0, %s49
      %s71 = sphi 0, %s73
      %s74 = sphi 0, %s71
      %s75 = sphi 0, %s74
      %s91 = sphi 0, %s75
      %s97 = sphi 0, %s99
      %s100 = sphi 0, %s97
      %s101 = sphi 0, %s100
      %s117 = sphi 0, %s101
      %s127 = sphi 0, %s129
      %s130 = sphi 0, %s127
      %s131 = sphi 0, %s130
      %s147 = sphi 0, %s131
    $region4: #{tpu_custom_call.1} parent=1 // loop_header_branch
      %19 = sbr.rel (%p17) target = $region8
    $region5: #{tpu_custom_call.1} parent=1 // loop_body
      %s21 = ssub.s32 %s16, 1
      %s22 = ssub.s32 %s16, 2
      %s32 = sadd.s32 1, %s25
      %p33 = scmp.ge.s32.totalorder %s32, 6
      %s34 = scalar_select %p33, 0, %s32
      %s35 = sadd.s32 1, %s24
      %s36 = scalar_select %p33, %s35, %s24
      %p37 = scmp.ge.s32.totalorder %s36, 1
      %s38 = scalar_select %p37, 0, %s36
      %s39 = sadd.s32 1, %s23
      %s40 = scalar_select %p37, %s39, %s23
      %p41 = scmp.ge.s32.totalorder %s40, 2
      %s42 = scalar_select %p41, 0, %s40
      %s43 = ssub.s32 %s23, %s42
      %p44 = scmp.eq.s32.totalorder %s43, 0
      %s46 = sadd.s32 %s45, 1
      %s47 = scalar_select %p44, %s45, %s46
      %p50 = pneg %p44
      %p51 = scmp.eq.s32.totalorder %s16, 11
      %p52 = por %p50, %p51
      %p53 = scmp.ne.s32.totalorder %s45, %s48
      %p54 = scmp.eq.s32.totalorder %s16, 0
      %p55 = por %p53, %p54
      %p56 = scmp.ne.s32.totalorder %s45, %s48
      %p57 = scmp.eq.s32.totalorder %s21, 11
      %p58 = por %p56, %p57
      %p59 = scmp.ne.s32.totalorder %s48, %s49
      %p60 = scmp.eq.s32.totalorder %s21, 0
      %p61 = por %p59, %p60
      %p62 = scmp.ne.s32.totalorder %s48, %s49
      %p63 = scmp.eq.s32.totalorder %s22, 11
      %p64 = por %p62, %p63
      %p66 = scmp.ne.s32.totalorder %s49, %s65
      %p67 = scmp.eq.s32.totalorder %s22, 0
      %p68 = por %p66, %p67
      %s69 = ssub.s32 %s24, %s38
      %p70 = scmp.eq.s32.totalorder %s69, 0
      %s72 = sadd.s32 %s71, 1
      %s73 = scalar_select %p70, %s71, %s72
      %p76 = pneg %p70
      %p77 = scmp.eq.s32.totalorder %s16, 11
      %p78 = por %p76, %p77
      %p79 = scmp.ne.s32.totalorder %s71, %s74
      %p80 = scmp.eq.s32.totalorder %s16, 0
      %p81 = por %p79, %p80
      %p82 = scmp.ne.s32.totalorder %s71, %s74
      %p83 = scmp.eq.s32.totalorder %s21, 11
      %p84 = por %p82, %p83
      %p85 = scmp.ne.s32.totalorder %s74, %s75
      %p86 = scmp.eq.s32.totalorder %s21, 0
      %p87 = por %p85, %p86
      %p88 = scmp.ne.s32.totalorder %s74, %s75
      %p89 = scmp.eq.s32.totalorder %s22, 11
      %p90 = por %p88, %p89
      %p92 = scmp.ne.s32.totalorder %s75, %s91
      %p93 = scmp.eq.s32.totalorder %s22, 0
      %p94 = por %p92, %p93
      %s95 = ssub.s32 %s24, %s38
      %p96 = scmp.eq.s32.totalorder %s95, 0
      %s98 = sadd.s32 %s97, 1
      %s99 = scalar_select %p96, %s97, %s98
      %p102 = pneg %p96
      %p103 = scmp.eq.s32.totalorder %s16, 11
      %p104 = por %p102, %p103
      %p105 = scmp.ne.s32.totalorder %s97, %s100
      %p106 = scmp.eq.s32.totalorder %s16, 0
      %p107 = por %p105, %p106
      %p108 = scmp.ne.s32.totalorder %s97, %s100
      %p109 = scmp.eq.s32.totalorder %s21, 11
      %p110 = por %p108, %p109
      %p111 = scmp.ne.s32.totalorder %s100, %s101
      %p112 = scmp.eq.s32.totalorder %s21, 0
      %p113 = por %p111, %p112
      %p114 = scmp.ne.s32.totalorder %s100, %s101
      %p115 = scmp.eq.s32.totalorder %s22, 11
      %p116 = por %p114, %p115
      %p118 = scmp.ne.s32.totalorder %s101, %s117
      %p119 = scmp.eq.s32.totalorder %s22, 0
      %p120 = por %p118, %p119
      %s121 = ssub.s32 %s23, %s42
      %s122 = ssub.s32 %s25, %s34
      %s123 = sor.u32 %s121, %s122
      %s124 = ssub.s32 %s24, %s38
      %s125 = sor.u32 %s123, %s124
      %p126 = scmp.eq.s32.totalorder %s125, 0
      %s128 = sadd.s32 %s127, 1
      %s129 = scalar_select %p126, %s127, %s128
      %p132 = pneg %p126
      %p133 = scmp.eq.s32.totalorder %s16, 11
      %p134 = por %p132, %p133
      %p135 = scmp.ne.s32.totalorder %s127, %s130
      %p136 = scmp.eq.s32.totalorder %s16, 0
      %p137 = por %p135, %p136
      %p138 = scmp.ne.s32.totalorder %s127, %s130
      %p139 = scmp.eq.s32.totalorder %s21, 11
      %p140 = por %p138, %p139
      %p141 = scmp.ne.s32.totalorder %s130, %s131
      %p142 = scmp.eq.s32.totalorder %s21, 0
      %p143 = por %p141, %p142
      %p144 = scmp.ne.s32.totalorder %s130, %s131
      %p145 = scmp.eq.s32.totalorder %s22, 11
      %p146 = por %p144, %p145
      %p148 = scmp.ne.s32.totalorder %s131, %s147
      %p149 = scmp.eq.s32.totalorder %s22, 0
      %p150 = por %p148, %p149
      %p151 = scmp.le.s32.totalorder 1, %s16
      %p152 = scmp.lt.s32.totalorder %s16, 13
      %p153 = pnand %p151, %p152
      %p154 = pneg %p153
      // Predicated region
      $region9: #{tpu_custom_call.1} parent=5 // pred_check
        _
      $region10: #{tpu_custom_call.1} parent=5 // pred_check_branch
        %156 = sbr.rel (%p153) target = $region12
      $region11: #{tpu_custom_call.1} parent=5 // pred_region
        %s157 = ssub.s32 %s16, 1
        // Predicated region
        $region13: #{tpu_custom_call.1} parent=11 // pred_check
          %p158 = pneg %p87
        $region14: #{tpu_custom_call.1} parent=11 // pred_check_branch
          %160 = sbr.rel (%p158) target = $region16
        $region15: #{tpu_custom_call.1} parent=11 // pred_region
          %s162 = ssub.s32 1024, 1024
          %163 = vsyncadd [#allocation6], %s162
          %s164 = smul.addr %s27, 64
          %s165 = scalar_lea.hbm %s1, %s164
          %s166 = sshll.u32 [#allocation5], 4
          %s167 = int_to_ptr.vmem [resolvable:$true] %s166
          %172 = dma.hbm_to_vmem [thread:$0]  %s165, 1024, %s167, [#allocation6], 64, 64, 4
        $region16: #{tpu_custom_call.1} parent=11 // pred_fallthru
          _
        // Predicated region
        $region17: #{tpu_custom_call.1} parent=11 // pred_check
          %p173 = pneg %p113
        $region18: #{tpu_custom_call.1} parent=11 // pred_check_branch
          %175 = sbr.rel (%p173) target = $region20
        $region19: #{tpu_custom_call.1} parent=11 // pred_region
          %s177 = ssub.s32 16, 16
          %178 = vsyncadd [#allocation6], %s177
          %s179 = smul.addr %s27, 16
          %s180 = scalar_lea.hbm %s2, %s179
          %s182 = sshll.u32 [#allocation7], 4
          %s183 = int_to_ptr.vmem [resolvable:$true] %s182
          %185 = dma.hbm_to_vmem [thread:$0]  %s180, 16, %s183, [#allocation6]
        $region20: #{tpu_custom_call.1} parent=11 // pred_fallthru
          _
      $region12: #{tpu_custom_call.1} parent=5 // pred_fallthru
        _
      %p186 = scmp.lt.s32.totalorder %s16, 12
      // Predicated region
      $region21: #{tpu_custom_call.1} parent=5 // pred_check
        %p187 = pneg %p186
      $region22: #{tpu_custom_call.1} parent=5 // pred_check_branch
        %189 = sbr.rel (%p187) target = $region24
      $region23: #{tpu_custom_call.1} parent=5 // pred_region
        // Predicated region
        $region25: #{tpu_custom_call.1} parent=23 // pred_check
          %p190 = pneg %p55
        $region26: #{tpu_custom_call.1} parent=23 // pred_check_branch
          %192 = sbr.rel (%p190) target = $region28
        $region27: #{tpu_custom_call.1} parent=23 // pred_region
          %s193 = sand.u32 %s45, 1
          %s194 = scalar_lea.sflag [#allocation3], %s193
          %s195 = sand.u32 %s45, 1
          %s196 = smul.addr %s195, 1536
          %s197 = scalar_lea.vmem [#allocation2], %s196
          %s199 = ssub.s32 24576, 24576
          %200 = vsyncadd %s194, %s199
          %s201 = smul.addr %s23, 384
          %s202 = smul.addr %s201, 64
          %s203 = scalar_lea.hbm %s0, %s202
          %s204 = sshll.u32 %s197, 4
          %s205 = int_to_ptr.vmem [resolvable:$true] %s204
          %210 = dma.hbm_to_vmem [thread:$0]  %s203, 24576, %s205, %s194, 64, 64, 4
        $region28: #{tpu_custom_call.1} parent=23 // pred_fallthru
          _
      $region24: #{tpu_custom_call.1} parent=5 // pred_fallthru
        _
      %p211 = scmp.le.s32.totalorder 1, %s16
      %p212 = scmp.lt.s32.totalorder %s16, 13
      %p213 = pnand %p211, %p212
      %p214 = pneg %p213
      // Predicated region
      $region29: #{tpu_custom_call.1} parent=5 // pred_check
        _
      $region30: #{tpu_custom_call.1} parent=5 // pred_check_branch
        %216 = sbr.rel (%p213) target = $region32
      $region31: #{tpu_custom_call.1} parent=5 // pred_region
        %s217 = ssub.s32 %s16, 1
        %s218 = sand.u32 %s48, 1
        %s219 = scalar_lea.sflag [#allocation3], %s218
        %s220 = sand.u32 %s48, 1
        %s221 = smul.addr %s220, 1536
        %s222 = scalar_lea.vmem [#allocation2], %s221
        // Predicated region
        $region33: #{tpu_custom_call.1} parent=31 // pred_check
          %p223 = pneg %p61
        $region34: #{tpu_custom_call.1} parent=31 // pred_check_branch
          %225 = sbr.rel (%p223) target = $region36
        $region35: #{tpu_custom_call.1} parent=31 // pred_region
          %226 = dma.done %s219, 24576
        $region36: #{tpu_custom_call.1} parent=31 // pred_fallthru
          _
        // Predicated region
        $region37: #{tpu_custom_call.1} parent=31 // pred_check
          %p227 = pneg %p87
        $region38: #{tpu_custom_call.1} parent=31 // pred_check_branch
          %229 = sbr.rel (%p227) target = $region40
        $region39: #{tpu_custom_call.1} parent=31 // pred_region
          %230 = dma.done [#allocation6], 1024
        $region40: #{tpu_custom_call.1} parent=31 // pred_fallthru
          _
        // Predicated region
        $region41: #{tpu_custom_call.1} parent=31 // pred_check
          %p231 = pneg %p113
        $region42: #{tpu_custom_call.1} parent=31 // pred_check_branch
          %233 = sbr.rel (%p231) target = $region44
        $region43: #{tpu_custom_call.1} parent=31 // pred_region
          %234 = dma.done [#allocation6], 16
        $region44: #{tpu_custom_call.1} parent=31 // pred_fallthru
          _
        %s235 = sand.u32 %s48, 1
        %s236 = scalar_lea.sflag [#allocation3], %s235
        %s237 = sand.u32 %s48, 1
        %s238 = smul.addr %s237, 1536
        %s239 = scalar_lea.vmem [#allocation2], %s238
        %p240 = pneg %p61
        %p241 = pneg %p58
        %p242 = pneg %p87
        %p243 = pneg %p84
        %p244 = pneg %p113
        %p245 = pneg %p110
        %p246 = pneg %p143
        %p247 = pneg %p140
        %s248 = sand.u32 %s130, 1
        %s249 = scalar_lea.sflag [#allocation4], %s248
        %s250 = sand.u32 %s130, 1
        %s251 = smul.addr %s250, 256
        %s252 = scalar_lea.vmem [#allocation8], %s251
        %s253 = smul.u32 64, %s28
        %s255 = smul.u32 %s28, 512
        %v256 = vld [vmem:[#allocation7] sm:$0x1]
        %v258 = vlaneseq
        %v259 = vshrl.u32 %v258, 7
        %v260 = vsub.s32 0, %v259
        %v261 = vrot.slane %v256, %v260
        %s263 = sshra.s32 %s255, 3
        %s264 = sand.u32 %s255, 7
        %s265 = smul.addr %s263, 4
        %s266 = scalar_lea.vmem %s222, %s265 [#allocation2]
        %v267 = vld [vmem:[%s266] sm:$0xf]
        %v268 = vld [vmem:[%s266 + $0x4] sm:$0xf]
        %v269 = vld [vmem:[%s266 + $0x8] sm:$0xf]
        %v270 = vld [vmem:[%s266 + $0xc] sm:$0xf]
        %v271 = vld [vmem:[%s266 + $0x10] sm:$0xf]
        %v272 = vld [vmem:[%s266 + $0x14] sm:$0xf]
        %v273 = vld [vmem:[%s266 + $0x18] sm:$0xf]
        %v274 = vld [vmem:[%s266 + $0x1c] sm:$0xf]
        %v275 = vld [vmem:[%s266 + $0x20] sm:$0xf]
        %v276 = vld [vmem:[%s266 + $0x24] sm:$0xf]
        %v277 = vld [vmem:[%s266 + $0x28] sm:$0xf]
        %v278 = vld [vmem:[%s266 + $0x2c] sm:$0xf]
        %v279 = vld [vmem:[%s266 + $0x30] sm:$0xf]
        %v280 = vld [vmem:[%s266 + $0x34] sm:$0xf]
        %v281 = vld [vmem:[%s266 + $0x38] sm:$0xf]
        %v282 = vld [vmem:[%s266 + $0x3c] sm:$0xf]
        %v283 = vld [vmem:[%s266 + $0x40] sm:$0xf]
        %v284 = vld [vmem:[%s266 + $0x44] sm:$0xf]
        %v285 = vld [vmem:[%s266 + $0x48] sm:$0xf]
        %v286 = vld [vmem:[%s266 + $0x4c] sm:$0xf]
        %v287 = vld [vmem:[%s266 + $0x50] sm:$0xf]
        %v288 = vld [vmem:[%s266 + $0x54] sm:$0xf]
        %v289 = vld [vmem:[%s266 + $0x58] sm:$0xf]
        %v290 = vld [vmem:[%s266 + $0x5c] sm:$0xf]
        %v291 = vld [vmem:[%s266 + $0x60] sm:$0xf]
        %v292 = vld [vmem:[%s266 + $0x64] sm:$0xf]
        %v293 = vld [vmem:[%s266 + $0x68] sm:$0xf]
        %v294 = vld [vmem:[%s266 + $0x6c] sm:$0xf]
        %v295 = vld [vmem:[%s266 + $0x70] sm:$0xf]
        %v296 = vld [vmem:[%s266 + $0x74] sm:$0xf]
        %v297 = vld [vmem:[%s266 + $0x78] sm:$0xf]
        %v298 = vld [vmem:[%s266 + $0x7c] sm:$0xf]
        %v299 = vld [vmem:[%s266 + $0x80] sm:$0xf]
        %v300 = vld [vmem:[%s266 + $0x84] sm:$0xf]
        %v301 = vld [vmem:[%s266 + $0x88] sm:$0xf]
        %v302 = vld [vmem:[%s266 + $0x8c] sm:$0xf]
        %v303 = vld [vmem:[%s266 + $0x90] sm:$0xf]
        %v304 = vld [vmem:[%s266 + $0x94] sm:$0xf]
        %v305 = vld [vmem:[%s266 + $0x98] sm:$0xf]
        %v306 = vld [vmem:[%s266 + $0x9c] sm:$0xf]
        %v307 = vld [vmem:[%s266 + $0xa0] sm:$0xf]
        %v308 = vld [vmem:[%s266 + $0xa4] sm:$0xf]
        %v309 = vld [vmem:[%s266 + $0xa8] sm:$0xf]
        %v310 = vld [vmem:[%s266 + $0xac] sm:$0xf]
        %v311 = vld [vmem:[%s266 + $0xb0] sm:$0xf]
        %v312 = vld [vmem:[%s266 + $0xb4] sm:$0xf]
        %v313 = vld [vmem:[%s266 + $0xb8] sm:$0xf]
        %v314 = vld [vmem:[%s266 + $0xbc] sm:$0xf]
        %v315 = vld [vmem:[%s266 + $0xc0] sm:$0xf]
        %v316 = vld [vmem:[%s266 + $0xc4] sm:$0xf]
        %v317 = vld [vmem:[%s266 + $0xc8] sm:$0xf]
        %v318 = vld [vmem:[%s266 + $0xcc] sm:$0xf]
        %v319 = vld [vmem:[%s266 + $0xd0] sm:$0xf]
        %v320 = vld [vmem:[%s266 + $0xd4] sm:$0xf]
        %v321 = vld [vmem:[%s266 + $0xd8] sm:$0xf]
        %v322 = vld [vmem:[%s266 + $0xdc] sm:$0xf]
        %v323 = vld [vmem:[%s266 + $0xe0] sm:$0xf]
        %v324 = vld [vmem:[%s266 + $0xe4] sm:$0xf]
        %v325 = vld [vmem:[%s266 + $0xe8] sm:$0xf]
        %v326 = vld [vmem:[%s266 + $0xec] sm:$0xf]
        %v327 = vld [vmem:[%s266 + $0xf0] sm:$0xf]
        %v328 = vld [vmem:[%s266 + $0xf4] sm:$0xf]
        %v329 = vld [vmem:[%s266 + $0xf8] sm:$0xf]
        %v330 = vld [vmem:[%s266 + $0xfc] sm:$0xf]
        %v331 = vld [vmem:[#allocation5] sm:$0xf]
        %v332 = vld [vmem:[#allocation5 + $0x4] sm:$0xf]
        %v333 = vld [vmem:[#allocation5 + $0x8] sm:$0xf]
        %v334 = vld [vmem:[#allocation5 + $0xc] sm:$0xf]
        %v335 = vld [vmem:[#allocation5 + $0x10] sm:$0xf]
        %v336 = vld [vmem:[#allocation5 + $0x14] sm:$0xf]
        %v337 = vld [vmem:[#allocation5 + $0x18] sm:$0xf]
        %v338 = vld [vmem:[#allocation5 + $0x1c] sm:$0xf]
        %v339 = vld [vmem:[#allocation5 + $0x20] sm:$0xf]
        %v340 = vld [vmem:[#allocation5 + $0x24] sm:$0xf]
        %v341 = vld [vmem:[#allocation5 + $0x28] sm:$0xf]
        %v342 = vld [vmem:[#allocation5 + $0x2c] sm:$0xf]
        %v343 = vld [vmem:[#allocation5 + $0x30] sm:$0xf]
        %v344 = vld [vmem:[#allocation5 + $0x34] sm:$0xf]
        %v345 = vld [vmem:[#allocation5 + $0x38] sm:$0xf]
        %v346 = vld [vmem:[#allocation5 + $0x3c] sm:$0xf]
        %v411 = vunpack.c.l.b16 %v267
        %v412 = vunpack.c.l.b16 %v268
        %v413 = vunpack.c.l.b16 %v269
        %v414 = vunpack.c.l.b16 %v270
        %v415 = vunpack.c.l.b16 %v271
        %v416 = vunpack.c.l.b16 %v272
        %v417 = vunpack.c.l.b16 %v273
        %v418 = vunpack.c.l.b16 %v274
        %v419 = vunpack.c.l.b16 %v275
        %v420 = vunpack.c.l.b16 %v276
        %v421 = vunpack.c.l.b16 %v277
        %v422 = vunpack.c.l.b16 %v278
        %v423 = vunpack.c.l.b16 %v279
        %v424 = vunpack.c.l.b16 %v280
        %v425 = vunpack.c.l.b16 %v281
        %v426 = vunpack.c.l.b16 %v282
        %v427 = vunpack.c.l.b16 %v283
        %v428 = vunpack.c.l.b16 %v284
        %v429 = vunpack.c.l.b16 %v285
        %v430 = vunpack.c.l.b16 %v286
        %v431 = vunpack.c.l.b16 %v287
        %v432 = vunpack.c.l.b16 %v288
        %v433 = vunpack.c.l.b16 %v289
        %v434 = vunpack.c.l.b16 %v290
        %v435 = vunpack.c.l.b16 %v291
        %v436 = vunpack.c.l.b16 %v292
        %v437 = vunpack.c.l.b16 %v293
        %v438 = vunpack.c.l.b16 %v294
        %v439 = vunpack.c.l.b16 %v295
        %v440 = vunpack.c.l.b16 %v296
        %v441 = vunpack.c.l.b16 %v297
        %v442 = vunpack.c.l.b16 %v298
        %v443 = vunpack.c.l.b16 %v299
        %v444 = vunpack.c.l.b16 %v300
        %v445 = vunpack.c.l.b16 %v301
        %v446 = vunpack.c.l.b16 %v302
        %v447 = vunpack.c.l.b16 %v303
        %v448 = vunpack.c.l.b16 %v304
        %v449 = vunpack.c.l.b16 %v305
        %v450 = vunpack.c.l.b16 %v306
        %v451 = vunpack.c.l.b16 %v307
        %v452 = vunpack.c.l.b16 %v308
        %v453 = vunpack.c.l.b16 %v309
        %v454 = vunpack.c.l.b16 %v310
        %v455 = vunpack.c.l.b16 %v311
        %v456 = vunpack.c.l.b16 %v312
        %v457 = vunpack.c.l.b16 %v313
        %v458 = vunpack.c.l.b16 %v314
        %v459 = vunpack.c.l.b16 %v315
        %v460 = vunpack.c.l.b16 %v316
        %v461 = vunpack.c.l.b16 %v317
        %v462 = vunpack.c.l.b16 %v318
        %v463 = vunpack.c.l.b16 %v319
        %v464 = vunpack.c.l.b16 %v320
        %v465 = vunpack.c.l.b16 %v321
        %v466 = vunpack.c.l.b16 %v322
        %v467 = vunpack.c.l.b16 %v323
        %v468 = vunpack.c.l.b16 %v324
        %v469 = vunpack.c.l.b16 %v325
        %v470 = vunpack.c.l.b16 %v326
        %v471 = vunpack.c.l.b16 %v327
        %v472 = vunpack.c.l.b16 %v328
        %v473 = vunpack.c.l.b16 %v329
        %v474 = vunpack.c.l.b16 %v330
        %v475 = vpack.c.b16 %v412, %v411
        %v476 = vpack.c.b16 %v414, %v413
        %v477 = vpack.c.b16 %v416, %v415
        %v478 = vpack.c.b16 %v418, %v417
        %v479 = vpack.c.b16 %v420, %v419
        %v480 = vpack.c.b16 %v422, %v421
        %v481 = vpack.c.b16 %v424, %v423
        %v482 = vpack.c.b16 %v426, %v425
        %v483 = vpack.c.b16 %v428, %v427
        %v484 = vpack.c.b16 %v430, %v429
        %v485 = vpack.c.b16 %v432, %v431
        %v486 = vpack.c.b16 %v434, %v433
        %v487 = vpack.c.b16 %v436, %v435
        %v488 = vpack.c.b16 %v438, %v437
        %v489 = vpack.c.b16 %v440, %v439
        %v490 = vpack.c.b16 %v442, %v441
        %v491 = vpack.c.b16 %v444, %v443
        %v492 = vpack.c.b16 %v446, %v445
        %v493 = vpack.c.b16 %v448, %v447
        %v494 = vpack.c.b16 %v450, %v449
        %v495 = vpack.c.b16 %v452, %v451
        %v496 = vpack.c.b16 %v454, %v453
        %v497 = vpack.c.b16 %v456, %v455
        %v498 = vpack.c.b16 %v458, %v457
        %v499 = vpack.c.b16 %v460, %v459
        %v500 = vpack.c.b16 %v462, %v461
        %v501 = vpack.c.b16 %v464, %v463
        %v502 = vpack.c.b16 %v466, %v465
        %v503 = vpack.c.b16 %v468, %v467
        %v504 = vpack.c.b16 %v470, %v469
        %v505 = vpack.c.b16 %v472, %v471
        %v506 = vpack.c.b16 %v474, %v473
        %v555 = vunpack.c.l.b16 %v331
        %v556 = vunpack.c.l.b16 %v332
        %v557 = vunpack.c.l.b16 %v333
        %v558 = vunpack.c.l.b16 %v334
        %v559 = vunpack.c.l.b16 %v335
        %v560 = vunpack.c.l.b16 %v336
        %v561 = vunpack.c.l.b16 %v337
        %v562 = vunpack.c.l.b16 %v338
        %v563 = vunpack.c.l.b16 %v339
        %v564 = vunpack.c.l.b16 %v340
        %v565 = vunpack.c.l.b16 %v341
        %v566 = vunpack.c.l.b16 %v342
        %v567 = vunpack.c.l.b16 %v343
        %v568 = vunpack.c.l.b16 %v344
        %v569 = vunpack.c.l.b16 %v345
        %v570 = vunpack.c.l.b16 %v346
        %v571 = vpack.c.b16 %v556, %v555
        %v572 = vpack.c.b16 %v558, %v557
        %v573 = vpack.c.b16 %v560, %v559
        %v574 = vpack.c.b16 %v562, %v561
        %v575 = vpack.c.b16 %v564, %v563
        %v576 = vpack.c.b16 %v566, %v565
        %v577 = vpack.c.b16 %v568, %v567
        %v578 = vpack.c.b16 %v570, %v569
        %587 = vmatprep.subr.bf16.mxu0 0
        %588 = vmatpush1.bf16.msra.mxu0 %v578
        %589 = vmatprep.subr.bf16.mxu0 0
        %590 = vmatpush1.bf16.msra.mxu0 %v577
        %591 = vmatprep.subr.bf16.mxu0 0
        %592 = vmatpush1.bf16.msra.mxu0 %v576
        %593 = vmatprep.subr.bf16.mxu0 0
        %594 = vmatpush1.bf16.msra.mxu0 %v575
        %595 = vmatprep.subr.bf16.mxu0 0
        %596 = vmatpush1.bf16.msra.mxu0 %v574
        %597 = vmatprep.subr.bf16.mxu0 0
        %598 = vmatpush1.bf16.msra.mxu0 %v573
        %599 = vmatprep.subr.bf16.mxu0 0
        %600 = vmatpush1.bf16.msra.mxu0 %v572
        %601 = vmatprep.subr.bf16.mxu0 0
        %602 = vmatpush1.bf16.msra.mxu0 %v571
        %603 = vmatprep.subr.bf16.mxu0 0
        %604 = vmatpush2.bf16.msra.mxu0 0
        %605 = vmatprep.subr.bf16.mxu0 0
        %606 = vmatpush2.bf16.msra.mxu0 0
        %607 = vmatprep.subr.bf16.mxu0 0
        %608 = vmatpush2.bf16.msra.mxu0 0
        %609 = vmatprep.subr.bf16.mxu0 0
        %610 = vmatpush2.bf16.msra.mxu0 0
        %611 = vmatprep.subr.bf16.mxu0 0
        %612 = vmatpush2.bf16.msra.mxu0 0
        %613 = vmatprep.subr.bf16.mxu0 0
        %614 = vmatpush2.bf16.msra.mxu0 0
        %615 = vmatprep.subr.bf16.mxu0 0
        %616 = vmatpush2.bf16.msra.mxu0 0
        %617 = vmatprep.subr.bf16.mxu0 0
        %618 = vmatpush2.bf16.msra.mxu0 0
        %619 = vmatprep.mubr.bf16.mxu0 0
        %620 = vmatmul.mubr.bf16.gmra.mxu0 %v475
        %v621 = vpop.f32.mrf.mxu0
        %v622 = vadd.f32 0.0, %v621
        %v623 = vpop.f32.mrf.mxu0
        %v624 = vpop.f32.mrf.mxu0
        %v625 = vadd.f32 0.0, %v624
        %v626 = vpop.f32.mrf.mxu0
        %627 = vmatprep.mubr.bf16.mxu0 0
        %628 = vmatmul.mubr.bf16.gmra.mxu0 %v476
        %v629 = vpop.f32.mrf.mxu0
        %v630 = vadd.f32 0.0, %v629
        %v631 = vpop.f32.mrf.mxu0
        %v632 = vpop.f32.mrf.mxu0
        %v633 = vadd.f32 0.0, %v632
        %v634 = vpop.f32.mrf.mxu0
        %635 = vmatprep.mubr.bf16.mxu0 0
        %636 = vmatmul.mubr.bf16.gmra.mxu0 %v477
        %v637 = vpop.f32.mrf.mxu0
        %v638 = vadd.f32 0.0, %v637
        %v639 = vpop.f32.mrf.mxu0
        %v640 = vpop.f32.mrf.mxu0
        %v641 = vadd.f32 0.0, %v640
        %v642 = vpop.f32.mrf.mxu0
        %643 = vmatprep.mubr.bf16.mxu0 0
        %644 = vmatmul.mubr.bf16.gmra.mxu0 %v478
        %v645 = vpop.f32.mrf.mxu0
        %v646 = vadd.f32 0.0, %v645
        %v647 = vpop.f32.mrf.mxu0
        %v648 = vpop.f32.mrf.mxu0
        %v649 = vadd.f32 0.0, %v648
        %v650 = vpop.f32.mrf.mxu0
        %651 = vmatprep.mubr.bf16.mxu0 0
        %652 = vmatmul.mubr.bf16.gmra.mxu0 %v479
        %v653 = vpop.f32.mrf.mxu0
        %v654 = vadd.f32 0.0, %v653
        %v655 = vpop.f32.mrf.mxu0
        %v656 = vpop.f32.mrf.mxu0
        %v657 = vadd.f32 0.0, %v656
        %v658 = vpop.f32.mrf.mxu0
        %659 = vmatprep.mubr.bf16.mxu0 0
        %660 = vmatmul.mubr.bf16.gmra.mxu0 %v480
        %v661 = vpop.f32.mrf.mxu0
        %v662 = vadd.f32 0.0, %v661
        %v663 = vpop.f32.mrf.mxu0
        %v664 = vpop.f32.mrf.mxu0
        %v665 = vadd.f32 0.0, %v664
        %v666 = vpop.f32.mrf.mxu0
        %667 = vmatprep.mubr.bf16.mxu0 0
        %668 = vmatmul.mubr.bf16.gmra.mxu0 %v481
        %v669 = vpop.f32.mrf.mxu0
        %v670 = vadd.f32 0.0, %v669
        %v671 = vpop.f32.mrf.mxu0
        %v672 = vpop.f32.mrf.mxu0
        %v673 = vadd.f32 0.0, %v672
        %v674 = vpop.f32.mrf.mxu0
        %675 = vmatprep.mubr.bf16.mxu0 0
        %676 = vmatmul.mubr.bf16.gmra.mxu0 %v482
        %v677 = vpop.f32.mrf.mxu0
        %v678 = vadd.f32 0.0, %v677
        %v679 = vpop.f32.mrf.mxu0
        %v680 = vpop.f32.mrf.mxu0
        %v681 = vadd.f32 0.0, %v680
        %v682 = vpop.f32.mrf.mxu0
        %683 = vmatprep.mubr.bf16.mxu0 0
        %684 = vmatmul.mubr.bf16.gmra.mxu0 %v483
        %v685 = vpop.f32.mrf.mxu0
        %v686 = vadd.f32 0.0, %v685
        %v687 = vpop.f32.mrf.mxu0
        %v688 = vpop.f32.mrf.mxu0
        %v689 = vadd.f32 0.0, %v688
        %v690 = vpop.f32.mrf.mxu0
        %691 = vmatprep.mubr.bf16.mxu0 0
        %692 = vmatmul.mubr.bf16.gmra.mxu0 %v484
        %v693 = vpop.f32.mrf.mxu0
        %v694 = vadd.f32 0.0, %v693
        %v695 = vpop.f32.mrf.mxu0
        %v696 = vpop.f32.mrf.mxu0
        %v697 = vadd.f32 0.0, %v696
        %v698 = vpop.f32.mrf.mxu0
        %699 = vmatprep.mubr.bf16.mxu0 0
        %700 = vmatmul.mubr.bf16.gmra.mxu0 %v485
        %v701 = vpop.f32.mrf.mxu0
        %v702 = vadd.f32 0.0, %v701
        %v703 = vpop.f32.mrf.mxu0
        %v704 = vpop.f32.mrf.mxu0
        %v705 = vadd.f32 0.0, %v704
        %v706 = vpop.f32.mrf.mxu0
        %707 = vmatprep.mubr.bf16.mxu0 0
        %708 = vmatmul.mubr.bf16.gmra.mxu0 %v486
        %v709 = vpop.f32.mrf.mxu0
        %v710 = vadd.f32 0.0, %v709
        %v711 = vpop.f32.mrf.mxu0
        %v712 = vpop.f32.mrf.mxu0
        %v713 = vadd.f32 0.0, %v712
        %v714 = vpop.f32.mrf.mxu0
        %715 = vmatprep.mubr.bf16.mxu0 0
        %716 = vmatmul.mubr.bf16.gmra.mxu0 %v487
        %v717 = vpop.f32.mrf.mxu0
        %v718 = vadd.f32 0.0, %v717
        %v719 = vpop.f32.mrf.mxu0
        %v720 = vpop.f32.mrf.mxu0
        %v721 = vadd.f32 0.0, %v720
        %v722 = vpop.f32.mrf.mxu0
        %723 = vmatprep.mubr.bf16.mxu0 0
        %724 = vmatmul.mubr.bf16.gmra.mxu0 %v488
        %v725 = vpop.f32.mrf.mxu0
        %v726 = vadd.f32 0.0, %v725
        %v727 = vpop.f32.mrf.mxu0
        %v728 = vpop.f32.mrf.mxu0
        %v729 = vadd.f32 0.0, %v728
        %v730 = vpop.f32.mrf.mxu0
        %731 = vmatprep.mubr.bf16.mxu0 0
        %732 = vmatmul.mubr.bf16.gmra.mxu0 %v489
        %v733 = vpop.f32.mrf.mxu0
        %v734 = vadd.f32 0.0, %v733
        %v735 = vpop.f32.mrf.mxu0
        %v736 = vpop.f32.mrf.mxu0
        %v737 = vadd.f32 0.0, %v736
        %v738 = vpop.f32.mrf.mxu0
        %739 = vmatprep.mubr.bf16.mxu0 0
        %740 = vmatmul.mubr.bf16.gmra.mxu0 %v490
        %v741 = vpop.f32.mrf.mxu0
        %v742 = vadd.f32 0.0, %v741
        %v743 = vpop.f32.mrf.mxu0
        %v744 = vpop.f32.mrf.mxu0
        %v745 = vadd.f32 0.0, %v744
        %v746 = vpop.f32.mrf.mxu0
        %747 = vmatprep.mubr.bf16.mxu0 0
        %748 = vmatmul.mubr.bf16.gmra.mxu0 %v491
        %v749 = vpop.f32.mrf.mxu0
        %v750 = vadd.f32 0.0, %v749
        %v751 = vpop.f32.mrf.mxu0
        %v752 = vpop.f32.mrf.mxu0
        %v753 = vadd.f32 0.0, %v752
        %v754 = vpop.f32.mrf.mxu0
        %755 = vmatprep.mubr.bf16.mxu0 0
        %756 = vmatmul.mubr.bf16.gmra.mxu0 %v492
        %v757 = vpop.f32.mrf.mxu0
        %v758 = vadd.f32 0.0, %v757
        %v759 = vpop.f32.mrf.mxu0
        %v760 = vpop.f32.mrf.mxu0
        %v761 = vadd.f32 0.0, %v760
        %v762 = vpop.f32.mrf.mxu0
        %763 = vmatprep.mubr.bf16.mxu0 0
        %764 = vmatmul.mubr.bf16.gmra.mxu0 %v493
        %v765 = vpop.f32.mrf.mxu0
        %v766 = vadd.f32 0.0, %v765
        %v767 = vpop.f32.mrf.mxu0
        %v768 = vpop.f32.mrf.mxu0
        %v769 = vadd.f32 0.0, %v768
        %v770 = vpop.f32.mrf.mxu0
        %771 = vmatprep.mubr.bf16.mxu0 0
        %772 = vmatmul.mubr.bf16.gmra.mxu0 %v494
        %v773 = vpop.f32.mrf.mxu0
        %v774 = vadd.f32 0.0, %v773
        %v775 = vpop.f32.mrf.mxu0
        %v776 = vpop.f32.mrf.mxu0
        %v777 = vadd.f32 0.0, %v776
        %v778 = vpop.f32.mrf.mxu0
        %779 = vmatprep.mubr.bf16.mxu0 0
        %780 = vmatmul.mubr.bf16.gmra.mxu0 %v495
        %v781 = vpop.f32.mrf.mxu0
        %v782 = vadd.f32 0.0, %v781
        %v783 = vpop.f32.mrf.mxu0
        %v784 = vpop.f32.mrf.mxu0
        %v785 = vadd.f32 0.0, %v784
        %v786 = vpop.f32.mrf.mxu0
        %787 = vmatprep.mubr.bf16.mxu0 0
        %788 = vmatmul.mubr.bf16.gmra.mxu0 %v496
        %v789 = vpop.f32.mrf.mxu0
        %v790 = vadd.f32 0.0, %v789
        %v791 = vpop.f32.mrf.mxu0
        %v792 = vpop.f32.mrf.mxu0
        %v793 = vadd.f32 0.0, %v792
        %v794 = vpop.f32.mrf.mxu0
        %795 = vmatprep.mubr.bf16.mxu0 0
        %796 = vmatmul.mubr.bf16.gmra.mxu0 %v497
        %v797 = vpop.f32.mrf.mxu0
        %v798 = vadd.f32 0.0, %v797
        %v799 = vpop.f32.mrf.mxu0
        %v800 = vpop.f32.mrf.mxu0
        %v801 = vadd.f32 0.0, %v800
        %v802 = vpop.f32.mrf.mxu0
        %803 = vmatprep.mubr.bf16.mxu0 0
        %804 = vmatmul.mubr.bf16.gmra.mxu0 %v498
        %v805 = vpop.f32.mrf.mxu0
        %v806 = vadd.f32 0.0, %v805
        %v807 = vpop.f32.mrf.mxu0
        %v808 = vpop.f32.mrf.mxu0
        %v809 = vadd.f32 0.0, %v808
        %v810 = vpop.f32.mrf.mxu0
        %811 = vmatprep.mubr.bf16.mxu0 0
        %812 = vmatmul.mubr.bf16.gmra.mxu0 %v499
        %v813 = vpop.f32.mrf.mxu0
        %v814 = vadd.f32 0.0, %v813
        %v815 = vpop.f32.mrf.mxu0
        %v816 = vpop.f32.mrf.mxu0
        %v817 = vadd.f32 0.0, %v816
        %v818 = vpop.f32.mrf.mxu0
        %819 = vmatprep.mubr.bf16.mxu0 0
        %820 = vmatmul.mubr.bf16.gmra.mxu0 %v500
        %v821 = vpop.f32.mrf.mxu0
        %v822 = vadd.f32 0.0, %v821
        %v823 = vpop.f32.mrf.mxu0
        %v824 = vpop.f32.mrf.mxu0
        %v825 = vadd.f32 0.0, %v824
        %v826 = vpop.f32.mrf.mxu0
        %827 = vmatprep.mubr.bf16.mxu0 0
        %828 = vmatmul.mubr.bf16.gmra.mxu0 %v501
        %v829 = vpop.f32.mrf.mxu0
        %v830 = vadd.f32 0.0, %v829
        %v831 = vpop.f32.mrf.mxu0
        %v832 = vpop.f32.mrf.mxu0
        %v833 = vadd.f32 0.0, %v832
        %v834 = vpop.f32.mrf.mxu0
        %835 = vmatprep.mubr.bf16.mxu0 0
        %836 = vmatmul.mubr.bf16.gmra.mxu0 %v502
        %v837 = vpop.f32.mrf.mxu0
        %v838 = vadd.f32 0.0, %v837
        %v839 = vpop.f32.mrf.mxu0
        %v840 = vpop.f32.mrf.mxu0
        %v841 = vadd.f32 0.0, %v840
        %v842 = vpop.f32.mrf.mxu0
        %843 = vmatprep.mubr.bf16.mxu0 0
        %844 = vmatmul.mubr.bf16.gmra.mxu0 %v503
        %v845 = vpop.f32.mrf.mxu0
        %v846 = vadd.f32 0.0, %v845
        %v847 = vpop.f32.mrf.mxu0
        %v848 = vpop.f32.mrf.mxu0
        %v849 = vadd.f32 0.0, %v848
        %v850 = vpop.f32.mrf.mxu0
        %851 = vmatprep.mubr.bf16.mxu0 0
        %852 = vmatmul.mubr.bf16.gmra.mxu0 %v504
        %v853 = vpop.f32.mrf.mxu0
        %v854 = vadd.f32 0.0, %v853
        %v855 = vpop.f32.mrf.mxu0
        %v856 = vpop.f32.mrf.mxu0
        %v857 = vadd.f32 0.0, %v856
        %v858 = vpop.f32.mrf.mxu0
        %859 = vmatprep.mubr.bf16.mxu0 0
        %860 = vmatmul.mubr.bf16.gmra.mxu0 %v505
        %v861 = vpop.f32.mrf.mxu0
        %v862 = vadd.f32 0.0, %v861
        %v863 = vpop.f32.mrf.mxu0
        %v864 = vpop.f32.mrf.mxu0
        %v865 = vadd.f32 0.0, %v864
        %v866 = vpop.f32.mrf.mxu0
        %867 = vmatprep.mubr.bf16.mxu0 0
        %868 = vmatmul.mubr.bf16.gmra.mxu0 %v506
        %v869 = vpop.f32.mrf.mxu0
        %v870 = vadd.f32 0.0, %v869
        %v871 = vpop.f32.mrf.mxu0
        %v872 = vpop.f32.mrf.mxu0
        %v873 = vadd.f32 0.0, %v872
        %v874 = vpop.f32.mrf.mxu0
        %875 = vdwg.mxu0
        %v876 = vadd.f32 %v261, %v622
        %v877 = vadd.f32 %v261, %v625
        %v878 = vadd.f32 %v261, %v630
        %v879 = vadd.f32 %v261, %v633
        %v880 = vadd.f32 %v261, %v638
        %v881 = vadd.f32 %v261, %v641
        %v882 = vadd.f32 %v261, %v646
        %v883 = vadd.f32 %v261, %v649
        %v884 = vadd.f32 %v261, %v654
        %v885 = vadd.f32 %v261, %v657
        %v886 = vadd.f32 %v261, %v662
        %v887 = vadd.f32 %v261, %v665
        %v888 = vadd.f32 %v261, %v670
        %v889 = vadd.f32 %v261, %v673
        %v890 = vadd.f32 %v261, %v678
        %v891 = vadd.f32 %v261, %v681
        %v892 = vadd.f32 %v261, %v686
        %v893 = vadd.f32 %v261, %v689
        %v894 = vadd.f32 %v261, %v694
        %v895 = vadd.f32 %v261, %v697
        %v896 = vadd.f32 %v261, %v702
        %v897 = vadd.f32 %v261, %v705
        %v898 = vadd.f32 %v261, %v710
        %v899 = vadd.f32 %v261, %v713
        %v900 = vadd.f32 %v261, %v718
        %v901 = vadd.f32 %v261, %v721
        %v902 = vadd.f32 %v261, %v726
        %v903 = vadd.f32 %v261, %v729
        %v904 = vadd.f32 %v261, %v734
        %v905 = vadd.f32 %v261, %v737
        %v906 = vadd.f32 %v261, %v742
        %v907 = vadd.f32 %v261, %v745
        %v908 = vadd.f32 %v261, %v750
        %v909 = vadd.f32 %v261, %v753
        %v910 = vadd.f32 %v261, %v758
        %v911 = vadd.f32 %v261, %v761
        %v912 = vadd.f32 %v261, %v766
        %v913 = vadd.f32 %v261, %v769
        %v914 = vadd.f32 %v261, %v774
        %v915 = vadd.f32 %v261, %v777
        %v916 = vadd.f32 %v261, %v782
        %v917 = vadd.f32 %v261, %v785
        %v918 = vadd.f32 %v261, %v790
        %v919 = vadd.f32 %v261, %v793
        %v920 = vadd.f32 %v261, %v798
        %v921 = vadd.f32 %v261, %v801
        %v922 = vadd.f32 %v261, %v806
        %v923 = vadd.f32 %v261, %v809
        %v924 = vadd.f32 %v261, %v814
        %v925 = vadd.f32 %v261, %v817
        %v926 = vadd.f32 %v261, %v822
        %v927 = vadd.f32 %v261, %v825
        %v928 = vadd.f32 %v261, %v830
        %v929 = vadd.f32 %v261, %v833
        %v930 = vadd.f32 %v261, %v838
        %v931 = vadd.f32 %v261, %v841
        %v932 = vadd.f32 %v261, %v846
        %v933 = vadd.f32 %v261, %v849
        %v934 = vadd.f32 %v261, %v854
        %v935 = vadd.f32 %v261, %v857
        %v936 = vadd.f32 %v261, %v862
        %v937 = vadd.f32 %v261, %v865
        %v938 = vadd.f32 %v261, %v870
        %v939 = vadd.f32 %v261, %v873
        %v940 = vpack.c.bf16 %v877, %v876
        %v941 = vpack.c.bf16 %v879, %v878
        %v942 = vpack.c.bf16 %v881, %v880
        %v943 = vpack.c.bf16 %v883, %v882
        %v944 = vpack.c.bf16 %v885, %v884
        %v945 = vpack.c.bf16 %v887, %v886
        %v946 = vpack.c.bf16 %v889, %v888
        %v947 = vpack.c.bf16 %v891, %v890
        %v948 = vpack.c.bf16 %v893, %v892
        %v949 = vpack.c.bf16 %v895, %v894
        %v950 = vpack.c.bf16 %v897, %v896
        %v951 = vpack.c.bf16 %v899, %v898
        %v952 = vpack.c.bf16 %v901, %v900
        %v953 = vpack.c.bf16 %v903, %v902
        %v954 = vpack.c.bf16 %v905, %v904
        %v955 = vpack.c.bf16 %v907, %v906
        %v956 = vpack.c.bf16 %v909, %v908
        %v957 = vpack.c.bf16 %v911, %v910
        %v958 = vpack.c.bf16 %v913, %v912
        %v959 = vpack.c.bf16 %v915, %v914
        %v960 = vpack.c.bf16 %v917, %v916
        %v961 = vpack.c.bf16 %v919, %v918
        %v962 = vpack.c.bf16 %v921, %v920
        %v963 = vpack.c.bf16 %v923, %v922
        %v964 = vpack.c.bf16 %v925, %v924
        %v965 = vpack.c.bf16 %v927, %v926
        %v966 = vpack.c.bf16 %v929, %v928
        %v967 = vpack.c.bf16 %v931, %v930
        %v968 = vpack.c.bf16 %v933, %v932
        %v969 = vpack.c.bf16 %v935, %v934
        %v970 = vpack.c.bf16 %v937, %v936
        %v971 = vpack.c.bf16 %v939, %v938
        %v1004 = vunpack.c.l.b16 %v940
        %v1005 = vunpack.c.h.b16 %v940
        %v1006 = vunpack.c.l.b16 %v941
        %v1007 = vunpack.c.h.b16 %v941
        %v1008 = vunpack.c.l.b16 %v942
        %v1009 = vunpack.c.h.b16 %v942
        %v1010 = vunpack.c.l.b16 %v943
        %v1011 = vunpack.c.h.b16 %v943
        %v1012 = vunpack.c.l.b16 %v944
        %v1013 = vunpack.c.h.b16 %v944
        %v1014 = vunpack.c.l.b16 %v945
        %v1015 = vunpack.c.h.b16 %v945
        %v1016 = vunpack.c.l.b16 %v946
        %v1017 = vunpack.c.h.b16 %v946
        %v1018 = vunpack.c.l.b16 %v947
        %v1019 = vunpack.c.h.b16 %v947
        %v1020 = vunpack.c.l.b16 %v948
        %v1021 = vunpack.c.h.b16 %v948
        %v1022 = vunpack.c.l.b16 %v949
        %v1023 = vunpack.c.h.b16 %v949
        %v1024 = vunpack.c.l.b16 %v950
        %v1025 = vunpack.c.h.b16 %v950
        %v1026 = vunpack.c.l.b16 %v951
        %v1027 = vunpack.c.h.b16 %v951
        %v1028 = vunpack.c.l.b16 %v952
        %v1029 = vunpack.c.h.b16 %v952
        %v1030 = vunpack.c.l.b16 %v953
        %v1031 = vunpack.c.h.b16 %v953
        %v1032 = vunpack.c.l.b16 %v954
        %v1033 = vunpack.c.h.b16 %v954
        %v1034 = vunpack.c.l.b16 %v955
        %v1035 = vunpack.c.h.b16 %v955
        %v1036 = vunpack.c.l.b16 %v956
        %v1037 = vunpack.c.h.b16 %v956
        %v1038 = vunpack.c.l.b16 %v957
        %v1039 = vunpack.c.h.b16 %v957
        %v1040 = vunpack.c.l.b16 %v958
        %v1041 = vunpack.c.h.b16 %v958
        %v1042 = vunpack.c.l.b16 %v959
        %v1043 = vunpack.c.h.b16 %v959
        %v1044 = vunpack.c.l.b16 %v960
        %v1045 = vunpack.c.h.b16 %v960
        %v1046 = vunpack.c.l.b16 %v961
        %v1047 = vunpack.c.h.b16 %v961
        %v1048 = vunpack.c.l.b16 %v962
        %v1049 = vunpack.c.h.b16 %v962
        %v1050 = vunpack.c.l.b16 %v963
        %v1051 = vunpack.c.h.b16 %v963
        %v1052 = vunpack.c.l.b16 %v964
        %v1053 = vunpack.c.h.b16 %v964
        %v1054 = vunpack.c.l.b16 %v965
        %v1055 = vunpack.c.h.b16 %v965
        %v1056 = vunpack.c.l.b16 %v966
        %v1057 = vunpack.c.h.b16 %v966
        %v1058 = vunpack.c.l.b16 %v967
        %v1059 = vunpack.c.h.b16 %v967
        %v1060 = vunpack.c.l.b16 %v968
        %v1061 = vunpack.c.h.b16 %v968
        %v1062 = vunpack.c.l.b16 %v969
        %v1063 = vunpack.c.h.b16 %v969
        %v1064 = vunpack.c.l.b16 %v970
        %v1065 = vunpack.c.h.b16 %v970
        %v1066 = vunpack.c.l.b16 %v971
        %v1067 = vunpack.c.h.b16 %v971
        %v1068 = vpack.c.b16 %v1004, %v1004
        %v1069 = vpack.c.b16 %v1005, %v1005
        %v1070 = vpack.c.b16 %v1006, %v1006
        %v1071 = vpack.c.b16 %v1007, %v1007
        %v1072 = vpack.c.b16 %v1008, %v1008
        %v1073 = vpack.c.b16 %v1009, %v1009
        %v1074 = vpack.c.b16 %v1010, %v1010
        %v1075 = vpack.c.b16 %v1011, %v1011
        %v1076 = vpack.c.b16 %v1012, %v1012
        %v1077 = vpack.c.b16 %v1013, %v1013
        %v1078 = vpack.c.b16 %v1014, %v1014
        %v1079 = vpack.c.b16 %v1015, %v1015
        %v1080 = vpack.c.b16 %v1016, %v1016
        %v1081 = vpack.c.b16 %v1017, %v1017
        %v1082 = vpack.c.b16 %v1018, %v1018
        %v1083 = vpack.c.b16 %v1019, %v1019
        %v1084 = vpack.c.b16 %v1020, %v1020
        %v1085 = vpack.c.b16 %v1021, %v1021
        %v1086 = vpack.c.b16 %v1022, %v1022
        %v1087 = vpack.c.b16 %v1023, %v1023
        %v1088 = vpack.c.b16 %v1024, %v1024
        %v1089 = vpack.c.b16 %v1025, %v1025
        %v1090 = vpack.c.b16 %v1026, %v1026
        %v1091 = vpack.c.b16 %v1027, %v1027
        %v1092 = vpack.c.b16 %v1028, %v1028
        %v1093 = vpack.c.b16 %v1029, %v1029
        %v1094 = vpack.c.b16 %v1030, %v1030
        %v1095 = vpack.c.b16 %v1031, %v1031
        %v1096 = vpack.c.b16 %v1032, %v1032
        %v1097 = vpack.c.b16 %v1033, %v1033
        %v1098 = vpack.c.b16 %v1034, %v1034
        %v1099 = vpack.c.b16 %v1035, %v1035
        %v1100 = vpack.c.b16 %v1036, %v1036
        %v1101 = vpack.c.b16 %v1037, %v1037
        %v1102 = vpack.c.b16 %v1038, %v1038
        %v1103 = vpack.c.b16 %v1039, %v1039
        %v1104 = vpack.c.b16 %v1040, %v1040
        %v1105 = vpack.c.b16 %v1041, %v1041
        %v1106 = vpack.c.b16 %v1042, %v1042
        %v1107 = vpack.c.b16 %v1043, %v1043
        %v1108 = vpack.c.b16 %v1044, %v1044
        %v1109 = vpack.c.b16 %v1045, %v1045
        %v1110 = vpack.c.b16 %v1046, %v1046
        %v1111 = vpack.c.b16 %v1047, %v1047
        %v1112 = vpack.c.b16 %v1048, %v1048
        %v1113 = vpack.c.b16 %v1049, %v1049
        %v1114 = vpack.c.b16 %v1050, %v1050
        %v1115 = vpack.c.b16 %v1051, %v1051
        %v1116 = vpack.c.b16 %v1052, %v1052
        %v1117 = vpack.c.b16 %v1053, %v1053
        %v1118 = vpack.c.b16 %v1054, %v1054
        %v1119 = vpack.c.b16 %v1055, %v1055
        %v1120 = vpack.c.b16 %v1056, %v1056
        %v1121 = vpack.c.b16 %v1057, %v1057
        %v1122 = vpack.c.b16 %v1058, %v1058
        %v1123 = vpack.c.b16 %v1059, %v1059
        %v1124 = vpack.c.b16 %v1060, %v1060
        %v1125 = vpack.c.b16 %v1061, %v1061
        %v1126 = vpack.c.b16 %v1062, %v1062
        %v1127 = vpack.c.b16 %v1063, %v1063
        %v1128 = vpack.c.b16 %v1064, %v1064
        %v1129 = vpack.c.b16 %v1065, %v1065
        %v1130 = vpack.c.b16 %v1066, %v1066
        %v1131 = vpack.c.b16 %v1067, %v1067
        %1196 = vst [vmem:[%s252] sm:$0xf] %v1068
        %1197 = vst [vmem:[%s252 + $0x4] sm:$0xf] %v1069
        %1198 = vst [vmem:[%s252 + $0x8] sm:$0xf] %v1070
        %1199 = vst [vmem:[%s252 + $0xc] sm:$0xf] %v1071
        %1200 = vst [vmem:[%s252 + $0x10] sm:$0xf] %v1072
        %1201 = vst [vmem:[%s252 + $0x14] sm:$0xf] %v1073
        %1202 = vst [vmem:[%s252 + $0x18] sm:$0xf] %v1074
        %1203 = vst [vmem:[%s252 + $0x1c] sm:$0xf] %v1075
        %1204 = vst [vmem:[%s252 + $0x20] sm:$0xf] %v1076
        %1205 = vst [vmem:[%s252 + $0x24] sm:$0xf] %v1077
        %1206 = vst [vmem:[%s252 + $0x28] sm:$0xf] %v1078
        %1207 = vst [vmem:[%s252 + $0x2c] sm:$0xf] %v1079
        %1208 = vst [vmem:[%s252 + $0x30] sm:$0xf] %v1080
        %1209 = vst [vmem:[%s252 + $0x34] sm:$0xf] %v1081
        %1210 = vst [vmem:[%s252 + $0x38] sm:$0xf] %v1082
        %1211 = vst [vmem:[%s252 + $0x3c] sm:$0xf] %v1083
        %1212 = vst [vmem:[%s252 + $0x40] sm:$0xf] %v1084
        %1213 = vst [vmem:[%s252 + $0x44] sm:$0xf] %v1085
        %1214 = vst [vmem:[%s252 + $0x48] sm:$0xf] %v1086
        %1215 = vst [vmem:[%s252 + $0x4c] sm:$0xf] %v1087
        %1216 = vst [vmem:[%s252 + $0x50] sm:$0xf] %v1088
        %1217 = vst [vmem:[%s252 + $0x54] sm:$0xf] %v1089
        %1218 = vst [vmem:[%s252 + $0x58] sm:$0xf] %v1090
        %1219 = vst [vmem:[%s252 + $0x5c] sm:$0xf] %v1091
        %1220 = vst [vmem:[%s252 + $0x60] sm:$0xf] %v1092
        %1221 = vst [vmem:[%s252 + $0x64] sm:$0xf] %v1093
        %1222 = vst [vmem:[%s252 + $0x68] sm:$0xf] %v1094
        %1223 = vst [vmem:[%s252 + $0x6c] sm:$0xf] %v1095
        %1224 = vst [vmem:[%s252 + $0x70] sm:$0xf] %v1096
        %1225 = vst [vmem:[%s252 + $0x74] sm:$0xf] %v1097
        %1226 = vst [vmem:[%s252 + $0x78] sm:$0xf] %v1098
        %1227 = vst [vmem:[%s252 + $0x7c] sm:$0xf] %v1099
        %1228 = vst [vmem:[%s252 + $0x80] sm:$0xf] %v1100
        %1229 = vst [vmem:[%s252 + $0x84] sm:$0xf] %v1101
        %1230 = vst [vmem:[%s252 + $0x88] sm:$0xf] %v1102
        %1231 = vst [vmem:[%s252 + $0x8c] sm:$0xf] %v1103
        %1232 = vst [vmem:[%s252 + $0x90] sm:$0xf] %v1104
        %1233 = vst [vmem:[%s252 + $0x94] sm:$0xf] %v1105
        %1234 = vst [vmem:[%s252 + $0x98] sm:$0xf] %v1106
        %1235 = vst [vmem:[%s252 + $0x9c] sm:$0xf] %v1107
        %1236 = vst [vmem:[%s252 + $0xa0] sm:$0xf] %v1108
        %1237 = vst [vmem:[%s252 + $0xa4] sm:$0xf] %v1109
        %1238 = vst [vmem:[%s252 + $0xa8] sm:$0xf] %v1110
        %1239 = vst [vmem:[%s252 + $0xac] sm:$0xf] %v1111
        %1240 = vst [vmem:[%s252 + $0xb0] sm:$0xf] %v1112
        %1241 = vst [vmem:[%s252 + $0xb4] sm:$0xf] %v1113
        %1242 = vst [vmem:[%s252 + $0xb8] sm:$0xf] %v1114
        %1243 = vst [vmem:[%s252 + $0xbc] sm:$0xf] %v1115
        %1244 = vst [vmem:[%s252 + $0xc0] sm:$0xf] %v1116
        %1245 = vst [vmem:[%s252 + $0xc4] sm:$0xf] %v1117
        %1246 = vst [vmem:[%s252 + $0xc8] sm:$0xf] %v1118
        %1247 = vst [vmem:[%s252 + $0xcc] sm:$0xf] %v1119
        %1248 = vst [vmem:[%s252 + $0xd0] sm:$0xf] %v1120
        %1249 = vst [vmem:[%s252 + $0xd4] sm:$0xf] %v1121
        %1250 = vst [vmem:[%s252 + $0xd8] sm:$0xf] %v1122
        %1251 = vst [vmem:[%s252 + $0xdc] sm:$0xf] %v1123
        %1252 = vst [vmem:[%s252 + $0xe0] sm:$0xf] %v1124
        %1253 = vst [vmem:[%s252 + $0xe4] sm:$0xf] %v1125
        %1254 = vst [vmem:[%s252 + $0xe8] sm:$0xf] %v1126
        %1255 = vst [vmem:[%s252 + $0xec] sm:$0xf] %v1127
        %1256 = vst [vmem:[%s252 + $0xf0] sm:$0xf] %v1128
        %1257 = vst [vmem:[%s252 + $0xf4] sm:$0xf] %v1129
        %1258 = vst [vmem:[%s252 + $0xf8] sm:$0xf] %v1130
        %1259 = vst [vmem:[%s252 + $0xfc] sm:$0xf] %v1131
        %s1260 = sand.u32 %s130, 1
        %s1261 = scalar_lea.sflag [#allocation4], %s1260
        %s1262 = sand.u32 %s130, 1
        %s1263 = smul.addr %s1262, 256
        %s1264 = scalar_lea.vmem [#allocation8], %s1263
        // Predicated region
        $region45: #{tpu_custom_call.1} parent=31 // pred_check
          %p1265 = pneg %p140
        $region46: #{tpu_custom_call.1} parent=31 // pred_check_branch
          %1267 = sbr.rel (%p1265) target = $region48
        $region47: #{tpu_custom_call.1} parent=31 // pred_region
          %s1268 = smul.u32 64, %s28
          %s1270 = ssub.s32 4096, 4096
          %1271 = vsyncadd %s1261, %s1270
          %s1272 = sadd.s32 %s27, %s1268
          %s1273 = smul.addr %s26, 384
          %s1274 = sadd.s32 %s1272, %s1273
          %s1275 = smul.addr %s1274, 64
          %s1276 = scalar_lea.hbm %s3, %s1275
          %s1277 = sshll.u32 %s1264, 4
          %s1278 = int_to_ptr.vmem [resolvable:$true] %s1277
          %1283 = dma.vmem_to_hbm [thread:$0]  %s1278, 4096, %s1276, %s1261, 64, 64, 4
        $region48: #{tpu_custom_call.1} parent=31 // pred_fallthru
          _
      $region32: #{tpu_custom_call.1} parent=5 // pred_fallthru
        _
      %p1284 = scmp.le.s32.totalorder 2, %s16
      // Predicated region
      $region49: #{tpu_custom_call.1} parent=5 // pred_check
        %p1285 = pneg %p1284
      $region50: #{tpu_custom_call.1} parent=5 // pred_check_branch
        %1287 = sbr.rel (%p1285) target = $region52
      $region51: #{tpu_custom_call.1} parent=5 // pred_region
        %s1288 = ssub.s32 %s16, 2
        // Predicated region
        $region53: #{tpu_custom_call.1} parent=51 // pred_check
          %p1289 = pneg %p146
        $region54: #{tpu_custom_call.1} parent=51 // pred_check_branch
          %1291 = sbr.rel (%p1289) target = $region56
        $region55: #{tpu_custom_call.1} parent=51 // pred_region
          %s1292 = sand.u32 %s131, 1
          %s1293 = scalar_lea.sflag [#allocation4], %s1292
          %s1294 = sand.u32 %s131, 1
          %s1295 = smul.addr %s1294, 256
          %s1296 = scalar_lea.vmem [#allocation8], %s1295
          %1297 = dma.done %s1293, 4096
        $region56: #{tpu_custom_call.1} parent=51 // pred_fallthru
          _
      $region52: #{tpu_custom_call.1} parent=5 // pred_fallthru
        _
    $region6: #{tpu_custom_call.1} parent=1 // loop_footer
      %s20 = sadd.s32 1, %s16
    $region7: #{tpu_custom_call.1} parent=1 // loop_footer_branch
      %15 = sbr.rel target = $region3
    $region8: #{tpu_custom_call.1} parent=1 // loop_exit
      _
    %1298 = vsyncpa [#allocation3], 1
    %s1299 = scalar_lea.sflag [#allocation3], 1
    %1300 = vsyncpa %s1299, 1
    %1301 = vsyncpa [#allocation6], 1
    %1302 = vsyncpa [#allocation4], 1
    %s1303 = scalar_lea.sflag [#allocation4], 1
    %1304 = vsyncpa %s1303, 1

</llo_original>
